<compile_context>
chip_gen: v5e
topology: v5e:2x2
jax: 0.10.0
libtpu: 0.0.40
codegen_flags: <defaults>
</compile_context>

<pallas_src>
import functools

import jax
import jax.numpy as jnp
import numpy as np
from jax.experimental import pallas as pl
from jax.experimental.pallas import tpu as pltpu

_NEG_INF = -1e30
_EPS = 1e-18


def _round_up(x, m):
    return (x + m - 1) // m * m


def _tpu_kind():
    try:
        return jax.devices()[0].device_kind.lower()
    except Exception:
        return ""


def _vmem_limit_bytes():
    cap = 64 * 1024 * 1024
    try:
        info = pltpu.get_tpu_info()
        cap = int(getattr(info, "vmem_capacity_bytes", cap))
    except Exception:
        pass
    # ~3/4 of physical: ~96 MiB on v5e/v6e (128 MiB), ~48 MiB on v7x (64 MiB).
    return min((cap // 4) * 3, 100 * 1024 * 1024)


# --------------------------------------------------------------------------
# Pass 1: streamed logsumexp over the vocab axis (online max / sum-exp).
# --------------------------------------------------------------------------
def _stats_kernel(x_ref, w_ref, b_ref, lse_ref, m_sc, l_sc, *, temp, vocab, tv):
    v = pl.program_id(2)

    @pl.when(v == 0)
    def _():
        m_sc[...] = jnp.full_like(m_sc, _NEG_INF)
        l_sc[...] = jnp.zeros_like(l_sc)

    xb = x_ref[0].astype(jnp.bfloat16)                               # (tT, D)
    z = jnp.dot(xb, w_ref[...], preferred_element_type=jnp.float32)  # (tT, tV)
    z = z + b_ref[...]
    if float(temp) != 1.0:
        z = z * (1.0 / float(temp))

    # Mask pad columns (>= V) so they don't contribute to the softmax stats.
    col = v * tv + jax.lax.broadcasted_iota(jnp.int32, z.shape, 1)
    z = jnp.where(col < vocab, z, _NEG_INF)

    m_prev = m_sc[...]
    m_new = jnp.maximum(m_prev, jnp.max(z, axis=-1, keepdims=True))
    l_sc[...] = (l_sc[...] * jnp.exp(m_prev - m_new)
                 + jnp.sum(jnp.exp(z - m_new), axis=-1, keepdims=True))
    m_sc[...] = m_new

    @pl.when(v == pl.num_programs(2) - 1)
    def _():
        lse_ref[0] = m_sc[...] + jnp.log(l_sc[...])


# --------------------------------------------------------------------------
# Pass 2: per-(tT, tV) output tiles of the final log-probabilities.
# --------------------------------------------------------------------------
def _output_kernel(x_ref, attn_ref, ids_ref, lse_ref, w_ref, b_ref,
                   wpg_ref, bpg_ref, out_ref, alpha_sc, attn_sc,
                   *, temp, vocab, tv):
    v = pl.program_id(2)
    inv_temp = 1.0 / float(temp)

    xb = x_ref[0].astype(jnp.bfloat16)                               # (tT, D)

    # Per-(b, t) work: p_gen/alpha and the attention softmax -> VMEM scratch.
    @pl.when(v == 0)
    def _():
        pg = jnp.dot(xb, wpg_ref[...], preferred_element_type=jnp.float32)  # (tT, 128)
        p_gen = pg[:, :1] + bpg_ref[...][:, :1]                             # (tT, 1)
        alpha = jax.nn.sigmoid(p_gen)
        alpha_sc[...] = alpha

        a = attn_ref[0]                                                     # (tT, S)
        if float(temp) != 1.0:
            a = a * inv_temp
        a = a - jnp.max(a, axis=-1, keepdims=True)
        ea = jnp.exp(a)
        attn_sm = ea / jnp.sum(ea, axis=-1, keepdims=True)     # exact denominator
        attn_sc[...] = (1.0 - alpha) * attn_sm

    # Vocab-distribution contribution for this V tile (exact global softmax
    # via exp(z - lse); no approx reciprocal).
    z = jnp.dot(xb, w_ref[...], preferred_element_type=jnp.float32) + b_ref[...]
    if float(temp) != 1.0:
        z = z * inv_temp
    col = v * tv + jax.lax.broadcasted_iota(jnp.int32, z.shape, 1)
    vocab_part = alpha_sc[...] * jnp.exp(z - lse_ref[0])                 # (tT, tV)
    vocab_part = jnp.where(col < vocab, vocab_part, 0.0)

    # Scatter-add along vocab for this column slice only: (S, tV) one-hot matmul.
    ids = ids_ref[0]                                                     # (S, 1) int32
    col_s = v * tv + jax.lax.broadcasted_iota(jnp.int32, (ids.shape[0], tv), 1)
    onehot = (ids == col_s).astype(jnp.bfloat16)                         # (S, tV)
    scatter = jnp.dot(attn_sc[...].astype(jnp.bfloat16), onehot,
                      preferred_element_type=jnp.float32)                # (tT, tV)

    out_ref[0] = jnp.log(vocab_part + scatter + _EPS)


def generator_forward(x, attn_dist, enc_ids, params, *, max_oov, temp=1.0,
                      t_tile=None, v_tile=None):
    """Returns (B, T, Vxp) log-probs; columns >= V+max_oov are pad = log(1e-18)."""
    B, T, D = x.shape
    S = attn_dist.shape[-1]
    V = params["w_proj"].shape[1]
    Vx = V + max_oov

    kind = _tpu_kind()
    if t_tile is None:
        t_cap = 128 if "v5" in kind else 256      # v6e/v7x MXU is 2x256^2
        t_tile = T if T <= t_cap else t_cap
    assert T % t_tile == 0, "T must be divisible by the T tile"

    if v_tile is None:
        v_tile = 2048                              # review: 1-2k v7x, 2-4k v5e/v6e
    v_tile = min(v_tile, _round_up(Vx, 128))
    assert v_tile % 128 == 0

    Vxp = _round_up(Vx, v_tile)                    # lane-dense padded extended vocab
    nv_out = Vxp // v_tile
    nv_stats = (V + v_tile - 1) // v_tile

    # bf16-at-rest weights (halves HBM->VMEM DMA bytes and VMEM residency).
    w_pad = jnp.zeros((D, Vxp), jnp.bfloat16).at[:, :V].set(
        params["w_proj"].astype(jnp.bfloat16))
    b_pad = jnp.zeros((1, Vxp), jnp.float32).at[:, :V].set(params["b_proj"])
    w_pgen = jnp.zeros((D, 128), jnp.bfloat16).at[:, :1].set(
        params["w_pgen"].T.astype(jnp.bfloat16))
    b_pgen = jnp.zeros((1, 128), jnp.float32).at[:, :1].set(params["b_pgen"])

    vmem = _vmem_limit_bytes()
    sem = ("parallel", "parallel", "arbitrary")

    # ---- pass 1: logsumexp over the (streamed) vocab axis -------------------
    lse = pl.pallas_call(
        functools.partial(_stats_kernel, temp=float(temp), vocab=V, tv=v_tile),
        out_shape=jax.ShapeDtypeStruct((B, T, 1), jnp.float32),
        grid_spec=pltpu.PrefetchScalarGridSpec(
            num_scalar_prefetch=0,
            grid=(B, T // t_tile, nv_stats),
            in_specs=[
                pl.BlockSpec((1, t_tile, D), lambda b, t, v: (b, t, 0)),   # x
                pl.BlockSpec((D, v_tile),    lambda b, t, v: (0, v)),      # W tile
                pl.BlockSpec((1, v_tile),    lambda b, t, v: (0, v)),      # bias tile
            ],
            out_specs=pl.BlockSpec((1, t_tile, 1), lambda b, t, v: (b, t, 0)),
            scratch_shapes=[pltpu.VMEM((t_tile, 1), jnp.float32),          # running max
                            pltpu.VMEM((t_tile, 1), jnp.float32)],         # running sum
        ),
        compiler_params=pltpu.CompilerParams(
            dimension_semantics=sem, vmem_limit_bytes=vmem),
    )(x, w_pad, b_pad)

    # ---- pass 2: final log-prob tiles ---------------------------------------
    out = pl.pallas_call(
        functools.partial(_output_kernel, temp=float(temp), vocab=V, tv=v_tile),
        out_shape=jax.ShapeDtypeStruct((B, T, Vxp), jnp.float32),
        grid_spec=pltpu.PrefetchScalarGridSpec(
            num_scalar_prefetch=0,
            grid=(B, T // t_tile, nv_out),
            in_specs=[
                pl.BlockSpec((1, t_tile, D), lambda b, t, v: (b, t, 0)),   # x
                pl.BlockSpec((1, t_tile, S), lambda b, t, v: (b, t, 0)),   # attn logits
                pl.BlockSpec((1, S, 1),      lambda b, t, v: (b, 0, 0)),   # enc ids
                pl.BlockSpec((1, t_tile, 1), lambda b, t, v: (b, t, 0)),   # lse
                pl.BlockSpec((D, v_tile),    lambda b, t, v: (0, v)),      # W tile
                pl.BlockSpec((1, v_tile),    lambda b, t, v: (0, v)),      # bias tile
                pl.BlockSpec((D, 128),       lambda b, t, v: (0, 0)),      # w_pgen
                pl.BlockSpec((1, 128),       lambda b, t, v: (0, 0)),      # b_pgen
            ],
            out_specs=pl.BlockSpec((1, t_tile, v_tile), lambda b, t, v: (b, t, v)),
            scratch_shapes=[pltpu.VMEM((t_tile, 1), jnp.float32),          # alpha
                            pltpu.VMEM((t_tile, S), jnp.float32)],         # (1-a)*attn_sm
        ),
        compiler_params=pltpu.CompilerParams(
            dimension_semantics=sem, vmem_limit_bytes=vmem),
    )(x, attn_dist, enc_ids, lse, w_pad, b_pad, w_pgen, b_pgen)

    # No trailing [..., :Vx] slice (saves a full extra HBM read+write of the
    # dominant output); pad columns are documented filler.
    return out


def reference_forward(x, attn_dist, enc_ids, params, *, max_oov, temp=1.0):
    # Pure f32 reference mirroring the torch module semantics.
    V = params["w_proj"].shape[1]
    Vx = V + max_oov
    p_gen = jnp.einsum("btd,d->bt", x, params["w_pgen"][0])[..., None] \
        + params["b_pgen"][0, 0]
    alpha = jax.nn.sigmoid(p_gen)
    logit = jnp.einsum("btd,dv->btv", x, params["w_proj"]) + params["b_proj"]
    vocab_dist_ = alpha * jax.nn.softmax(logit / temp, axis=-1)
    attn_dist_ = (1.0 - alpha) * jax.nn.softmax(attn_dist / temp, axis=-1)
    onehot = jax.nn.one_hot(enc_ids[..., 0], Vx, dtype=jnp.float32)   # (B,S,Vx)
    scatter = jnp.einsum("bts,bsv->btv", attn_dist_, onehot)
    vocab_padded = jnp.pad(vocab_dist_, ((0, 0), (0, 0), (0, max_oov)))
    return jnp.log(vocab_padded + scatter + 1e-18)


if __name__ == "__main__":
    B, T, D, S, V, MAX_OOV = 2, 8, 32, 16, 128, 8

    key = jax.random.PRNGKey(0)
    k = jax.random.split(key, 8)
    scale = 1.0 / np.sqrt(D)
    params = {
        "w_proj": jax.random.uniform(k[0], (D, V), jnp.float32, -scale, scale),
        "b_proj": jax.random.uniform(k[1], (1, V), jnp.float32, -scale, scale),
        "w_pgen": jax.random.uniform(k[2], (1, D), jnp.float32, -scale, scale),
        "b_pgen": jax.random.uniform(k[3], (1, 1), jnp.float32, -scale, scale),
    }
    x = jax.random.normal(k[4], (B, T, D), jnp.float32)
    attn_logits = jax.random.normal(k[5], (B, T, S), jnp.float32)
    enc_ids = jax.random.randint(k[6], (B, S, 1), 0, V + MAX_OOV, jnp.int32)

    Vx = V + MAX_OOV
    # v_tile=128 forces a 2-tile vocab stream so the online-softmax path,
    # the per-tile masking and the scatter column-slicing are all exercised.
    for temp in (1.0, 1.5):
        out = generator_forward(x, attn_logits, enc_ids, params,
                                max_oov=MAX_OOV, temp=temp, v_tile=128)
        out = jax.block_until_ready(out)
        ref = jax.block_until_ready(
            reference_forward(x, attn_logits, enc_ids, params,
                              max_oov=MAX_OOV, temp=temp))

        assert out.shape[:2] == (B, T) and out.shape[2] >= Vx, out.shape
        assert out.shape[2] % 128 == 0, out.shape
        # Tolerance covers the bf16 matmul inputs (f32 accumulation); softmax
        # denominators are now exact (no approx reciprocal).
        np.testing.assert_allclose(np.asarray(out[..., :Vx]), np.asarray(ref),
                                   rtol=2e-2, atol=5e-3)

    print("KERNEL_OK")
</pallas_src>

<mosaic_0001>
module attributes {stable_mosaic.version = 11 : i64} {
  func.func @_stats_kernel(%arg0: i32, %arg1: i32, %arg2: i32, %arg3: memref<1x8x32xf32, #tpu.memory_space<vmem>>, %arg4: memref<32x128xbf16, #tpu.memory_space<vmem>>, %arg5: memref<1x128xf32, #tpu.memory_space<vmem>>, %arg6: memref<1x8x1xf32, #tpu.memory_space<vmem>>, %arg7: memref<8x1xf32, #tpu.memory_space<vmem>>, %arg8: memref<8x1xf32, #tpu.memory_space<vmem>>) attributes {dimension_semantics = [#tpu.dimension_semantics<parallel>, #tpu.dimension_semantics<parallel>, #tpu.dimension_semantics<arbitrary>], iteration_bounds = array<i64: 2, 1, 1>, scalar_prefetch = 0 : i64, scratch_operands = 2 : i64, tpu.core_type = #tpu.core_type<tc>, window_params = [{transform_indices = @transform_0, window_bounds = array<i64: 1, 8, 32>}, {transform_indices = @transform_1, window_bounds = array<i64: 32, 128>}, {transform_indices = @transform_2, window_bounds = array<i64: 1, 128>}, {transform_indices = @transform_3, window_bounds = array<i64: 1, 8, 1>}]} {
    %c0_i32 = arith.constant 0 : i32
    %0 = arith.cmpi eq, %arg2, %c0_i32 : i32
    %1 = arith.extui %0 : i1 to i32
    %c0_i32_0 = arith.constant 0 : i32
    %2 = arith.cmpi ne, %1, %c0_i32_0 : i32
    scf.if %2 {
      %cst_21 = arith.constant -1.000000e+30 : f32
      %38 = vector.broadcast %cst_21 : f32 to vector<8x1xf32>
      %c0_22 = arith.constant 0 : index
      %c0_23 = arith.constant 0 : index
      %39 = vector.load %arg7[%c0_22, %c0_23] : memref<8x1xf32, #tpu.memory_space<vmem>>, vector<8x1xf32>
      tpu.vector_store %arg7[%c0_22, %c0_23], %38 {strides = array<i32>} : memref<8x1xf32, #tpu.memory_space<vmem>>, vector<8x1xf32>,
      %cst_24 = arith.constant 0.000000e+00 : f32
      %40 = vector.broadcast %cst_24 : f32 to vector<8x1xf32>
      %c0_25 = arith.constant 0 : index
      %c0_26 = arith.constant 0 : index
      %41 = vector.load %arg8[%c0_25, %c0_26] : memref<8x1xf32, #tpu.memory_space<vmem>>, vector<8x1xf32>
      tpu.vector_store %arg8[%c0_25, %c0_26], %40 {strides = array<i32>} : memref<8x1xf32, #tpu.memory_space<vmem>>, vector<8x1xf32>,
    } else {
    }
    %c0 = arith.constant 0 : index
    %c0_1 = arith.constant 0 : index
    %c0_2 = arith.constant 0 : index
    %3 = vector.load %arg3[%c0, %c0_1, %c0_2] : memref<1x8x32xf32, #tpu.memory_space<vmem>>, vector<1x8x32xf32>
    %4 = vector.shape_cast %3 : vector<1x8x32xf32> to vector<8x32xf32>
    %5 = arith.truncf %4 : vector<8x32xf32> to vector<8x32xbf16>
    %c0_3 = arith.constant 0 : index
    %c0_4 = arith.constant 0 : index
    %6 = vector.load %arg4[%c0_3, %c0_4] : memref<32x128xbf16, #tpu.memory_space<vmem>>, vector<32x128xbf16>
    %cst = arith.constant dense<0.000000e+00> : vector<8x128xf32>
    %7 = tpu.matmul %5, %6, %cst {dimension_numbers = #tpu.dot_dimension_numbers<[1], [0], [0], [1], [0, 0, 1, 1], [], []>} : vector<8x32xbf16>, vector<32x128xbf16>, vector<8x128xf32> -> vector<8x128xf32>
    %c0_5 = arith.constant 0 : index
    %c0_6 = arith.constant 0 : index
    %8 = vector.load %arg5[%c0_5, %c0_6] : memref<1x128xf32, #tpu.memory_space<vmem>>, vector<1x128xf32>
    %9 = vector.broadcast %8 : vector<1x128xf32> to vector<8x128xf32>
    %10 = arith.addf %7, %9 : vector<8x128xf32>
    %c128_i32 = arith.constant 128 : i32
    %11 = arith.muli %arg2, %c128_i32 : i32
    %12 = tpu.iota {dimensions = array<i32: 1>} : vector<8x128xi32>
    %13 = vector.broadcast %11 : i32 to vector<8x128xi32>
    %14 = arith.addi %13, %12 : vector<8x128xi32>
    %c128_i32_7 = arith.constant 128 : i32
    %15 = vector.broadcast %c128_i32_7 : i32 to vector<8x128xi32>
    %16 = arith.cmpi slt, %14, %15 : vector<8x128xi32>
    %cst_8 = arith.constant -1.000000e+30 : f32
    %17 = vector.broadcast %cst_8 : f32 to vector<8x128xf32>
    %18 = arith.select %16, %10, %17 : vector<8x128xi1>, vector<8x128xf32>
    %c0_9 = arith.constant 0 : index
    %c0_10 = arith.constant 0 : index
    %19 = vector.load %arg7[%c0_9, %c0_10] : memref<8x1xf32, #tpu.memory_space<vmem>>, vector<8x1xf32>
    %cst_11 = arith.constant dense<0xFF800000> : vector<8xf32>
    %20 = vector.multi_reduction <maximumf>, %18, %cst_11 [1] : vector<8x128xf32> to vector<8xf32>
    %21 = vector.shape_cast %20 : vector<8xf32> to vector<8x1xf32>
    %22 = arith.maximumf %19, %21 : vector<8x1xf32>
    %c0_12 = arith.constant 0 : index
    %c0_13 = arith.constant 0 : index
    %23 = vector.load %arg8[%c0_12, %c0_13] : memref<8x1xf32, #tpu.memory_space<vmem>>, vector<8x1xf32>
    %24 = arith.subf %19, %22 : vector<8x1xf32>
    %25 = math.exp %24 : vector<8x1xf32>
    %26 = arith.mulf %23, %25 : vector<8x1xf32>
    %27 = vector.broadcast %22 : vector<8x1xf32> to vector<8x128xf32>
    %28 = arith.subf %18, %27 : vector<8x128xf32>
    %29 = math.exp %28 : vector<8x128xf32>
    %cst_14 = arith.constant dense<0.000000e+00> : vector<8xf32>
    %30 = vector.multi_reduction <add>, %29, %cst_14 [1] : vector<8x128xf32> to vector<8xf32>
    %31 = vector.shape_cast %30 : vector<8xf32> to vector<8x1xf32>
    %32 = arith.addf %26, %31 : vector<8x1xf32>
    %c0_15 = arith.constant 0 : index
    %c0_16 = arith.constant 0 : index
    %33 = vector.load %arg8[%c0_15, %c0_16] : memref<8x1xf32, #tpu.memory_space<vmem>>, vector<8x1xf32>
    tpu.vector_store %arg8[%c0_15, %c0_16], %32 {strides = array<i32>} : memref<8x1xf32, #tpu.memory_space<vmem>>, vector<8x1xf32>,
    %c0_17 = arith.constant 0 : index
    %c0_18 = arith.constant 0 : index
    %34 = vector.load %arg7[%c0_17, %c0_18] : memref<8x1xf32, #tpu.memory_space<vmem>>, vector<8x1xf32>
    tpu.vector_store %arg7[%c0_17, %c0_18], %22 {strides = array<i32>} : memref<8x1xf32, #tpu.memory_space<vmem>>, vector<8x1xf32>,
    %c0_i32_19 = arith.constant 0 : i32
    %35 = arith.cmpi eq, %arg2, %c0_i32_19 : i32
    %36 = arith.extui %35 : i1 to i32
    %c0_i32_20 = arith.constant 0 : i32
    %37 = arith.cmpi ne, %36, %c0_i32_20 : i32
    scf.if %37 {
      %c0_21 = arith.constant 0 : index
      %c0_22 = arith.constant 0 : index
      %38 = vector.load %arg7[%c0_21, %c0_22] : memref<8x1xf32, #tpu.memory_space<vmem>>, vector<8x1xf32>
      %c0_23 = arith.constant 0 : index
      %c0_24 = arith.constant 0 : index
      %39 = vector.load %arg8[%c0_23, %c0_24] : memref<8x1xf32, #tpu.memory_space<vmem>>, vector<8x1xf32>
      %40 = math.log %39 : vector<8x1xf32>
      %41 = arith.addf %38, %40 : vector<8x1xf32>
      %c0_25 = arith.constant 0 : index
      %c0_26 = arith.constant 0 : index
      %c0_27 = arith.constant 0 : index
      %42 = vector.load %arg6[%c0_25, %c0_26, %c0_27] : memref<1x8x1xf32, #tpu.memory_space<vmem>>, vector<1x8x1xf32>
      %43 = vector.shape_cast %42 : vector<1x8x1xf32> to vector<8x1xf32>
      %44 = vector.shape_cast %41 : vector<8x1xf32> to vector<1x8x1xf32>
      tpu.vector_store %arg6[%c0_25, %c0_26, %c0_27], %44 {strides = array<i32>} : memref<1x8x1xf32, #tpu.memory_space<vmem>>, vector<1x8x1xf32>,
    } else {
    }
    return
  }
  func.func @transform_0(%arg0: i32, %arg1: i32, %arg2: i32) -> (i32, i32, i32) {
    %c0_i32 = arith.constant 0 : i32
    %c0_i32_0 = arith.constant 0 : i32
    return %arg0, %arg1, %c0_i32 : i32, i32, i32
  }
  func.func @transform_1(%arg0: i32, %arg1: i32, %arg2: i32) -> (i32, i32) {
    %c0_i32 = arith.constant 0 : i32
    %c0_i32_0 = arith.constant 0 : i32
    return %c0_i32, %arg2 : i32, i32
  }
  func.func @transform_2(%arg0: i32, %arg1: i32, %arg2: i32) -> (i32, i32) {
    %c0_i32 = arith.constant 0 : i32
    %c0_i32_0 = arith.constant 0 : i32
    return %c0_i32, %arg2 : i32, i32
  }
  func.func @transform_3(%arg0: i32, %arg1: i32, %arg2: i32) -> (i32, i32, i32) {
    %c0_i32 = arith.constant 0 : i32
    %c0_i32_0 = arith.constant 0 : i32
    return %arg0, %arg1, %c0_i32 : i32, i32, i32
  }
}

</mosaic_0001>

<llo_original>
// kernel: tpu_custom_call.1
$region0: #{tpu_custom_call.1}
  #allocation0 [shape = 'u32[]', space=smem, size = 0x4, offset = 0x4, fixed_abs, tag = 'smem constant byte address 0x4 - core index']
  #allocation1 [shape = 'u32[72,128]{1,0:T(1,128)}', space=vmem, size = 0x9000, scoped, tag = 'internal scratch']
  #allocation2 [shape = 'f32[8,1]{1,0:T(8,128)}', space=vmem, size = 0x1000, scoped, tag = 'scratch operand']
  #allocation3 [shape = 'f32[8,1]{1,0:T(8,128)}', space=vmem, size = 0x1000, scoped, tag = 'scratch operand']
  %s0 = inlined_call_operand.hbm [shape: f32[2,8,32], index: 0, kind: input, shape index: {}]
  %s1 = inlined_call_operand.hbm [shape: bf16[32,256], index: 1, kind: input, shape index: {}]
  %s2 = inlined_call_operand.hbm [shape: f32[1,256], index: 2, kind: input, shape index: {}]
  %s3 = inlined_call_operand.vmem [shape: f32[2,8,1], index: 3, kind: output, shape index: {}]
  %s4 = sld [smem:[#allocation0]]
  $region65: #{tpu_custom_call.1} parent=0
    _
  %s6 = ssub.s32 1, %s4
  %s7 = scalar_select 0, %s6, %s4
  $region1: #{tpu_custom_call.1} parent=0
    #allocation4 [shape = 'u8[8192]{0}', space=vmem, size = 0x2000, scoped, tag = 'input window, operand 0']
    #allocation5 [shape = 's32[2]{0}', space=sflag, size = 0x8, scoped, tag = 'scoped memory for tpu_custom_call.1']
    #allocation6 [shape = 'u8[8192]{0}', space=vmem, size = 0x2000, scoped, tag = 'input window, operand 1, single buffered']
    #allocation7 [shape = 's32[1]{0}', space=sflag, size = 0x4, scoped, tag = 'scoped memory for tpu_custom_call.1']
    #allocation8 [shape = 'u8[512]{0}', space=vmem, size = 0x400, scoped, tag = 'input window, operand 2, single buffered']
    %8 = vsyncpa [#allocation5], 0
    %s9 = scalar_lea.sflag [#allocation5], 1
    %10 = vsyncpa %s9, 0
    %11 = vsyncpa [#allocation7], 0
    loop: start=0, step=1, limit=4
    $region2: #{tpu_custom_call.1} parent=1 // loop_pre_header
      _
    $region3: #{tpu_custom_call.1} parent=1 // loop_header
      %s13 = sphi 0, %s17
      %p14 = scmp.ge.s32.totalorder %s13, 4
      %s20 = sphi 0, %s39
      %s21 = sphi 0, %s35
      %s22 = sphi 0, %s31
      %s23 = sphi 0, %s20
      %s24 = sphi 0, %s21
      %s25 = sphi 0, %s22
      %s26 = sphi 0, %s23
      %s27 = sphi 0, %s24
      %s28 = sphi 0, %s25
      %s44 = sphi 0, %s46
      %s47 = sphi 0, %s44
      %s48 = sphi 0, %s47
      %s64 = sphi 0, %s48
      %s70 = sphi 0, %s72
      %s73 = sphi 0, %s70
      %s74 = sphi 0, %s73
      %s90 = sphi 0, %s74
      %s96 = sphi 0, %s98
      %s99 = sphi 0, %s96
      %s100 = sphi 0, %s99
      %s116 = sphi 0, %s100
      %s124 = sphi 0, %s126
      %s127 = sphi 0, %s124
      %s128 = sphi 0, %s127
      %s144 = sphi 0, %s128
    $region4: #{tpu_custom_call.1} parent=1 // loop_header_branch
      %16 = sbr.rel (%p14) target = $region8
    $region5: #{tpu_custom_call.1} parent=1 // loop_body
      %s18 = ssub.s32 %s13, 1
      %s19 = ssub.s32 %s13, 2
      %s29 = sadd.s32 1, %s22
      %p30 = scmp.ge.s32.totalorder %s29, 1
      %s31 = scalar_select %p30, 0, %s29
      %s32 = sadd.s32 1, %s21
      %s33 = scalar_select %p30, %s32, %s21
      %p34 = scmp.ge.s32.totalorder %s33, 1
      %s35 = scalar_select %p34, 0, %s33
      %s36 = sadd.s32 1, %s20
      %s37 = scalar_select %p34, %s36, %s20
      %p38 = scmp.ge.s32.totalorder %s37, 2
      %s39 = scalar_select %p38, 0, %s37
      %s40 = ssub.s32 %s20, %s39
      %s41 = ssub.s32 %s21, %s35
      %s42 = sor.u32 %s40, %s41
      %p43 = scmp.eq.s32.totalorder %s42, 0
      %s45 = sadd.s32 %s44, 1
      %s46 = scalar_select %p43, %s44, %s45
      %p49 = pneg %p43
      %p50 = scmp.eq.s32.totalorder %s13, 1
      %p51 = por %p49, %p50
      %p52 = scmp.ne.s32.totalorder %s44, %s47
      %p53 = scmp.eq.s32.totalorder %s13, 0
      %p54 = por %p52, %p53
      %p55 = scmp.ne.s32.totalorder %s44, %s47
      %p56 = scmp.eq.s32.totalorder %s18, 1
      %p57 = por %p55, %p56
      %p58 = scmp.ne.s32.totalorder %s47, %s48
      %p59 = scmp.eq.s32.totalorder %s18, 0
      %p60 = por %p58, %p59
      %p61 = scmp.ne.s32.totalorder %s47, %s48
      %p62 = scmp.eq.s32.totalorder %s19, 1
      %p63 = por %p61, %p62
      %p65 = scmp.ne.s32.totalorder %s48, %s64
      %p66 = scmp.eq.s32.totalorder %s19, 0
      %p67 = por %p65, %p66
      %s68 = ssub.s32 %s22, %s31
      %p69 = scmp.eq.s32.totalorder %s68, 0
      %s71 = sadd.s32 %s70, 1
      %s72 = scalar_select %p69, %s70, %s71
      %p75 = pneg %p69
      %p76 = scmp.eq.s32.totalorder %s13, 1
      %p77 = por %p75, %p76
      %p78 = scmp.ne.s32.totalorder %s70, %s73
      %p79 = scmp.eq.s32.totalorder %s13, 0
      %p80 = por %p78, %p79
      %p81 = scmp.ne.s32.totalorder %s70, %s73
      %p82 = scmp.eq.s32.totalorder %s18, 1
      %p83 = por %p81, %p82
      %p84 = scmp.ne.s32.totalorder %s73, %s74
      %p85 = scmp.eq.s32.totalorder %s18, 0
      %p86 = por %p84, %p85
      %p87 = scmp.ne.s32.totalorder %s73, %s74
      %p88 = scmp.eq.s32.totalorder %s19, 1
      %p89 = por %p87, %p88
      %p91 = scmp.ne.s32.totalorder %s74, %s90
      %p92 = scmp.eq.s32.totalorder %s19, 0
      %p93 = por %p91, %p92
      %s94 = ssub.s32 %s22, %s31
      %p95 = scmp.eq.s32.totalorder %s94, 0
      %s97 = sadd.s32 %s96, 1
      %s98 = scalar_select %p95, %s96, %s97
      %p101 = pneg %p95
      %p102 = scmp.eq.s32.totalorder %s13, 1
      %p103 = por %p101, %p102
      %p104 = scmp.ne.s32.totalorder %s96, %s99
      %p105 = scmp.eq.s32.totalorder %s13, 0
      %p106 = por %p104, %p105
      %p107 = scmp.ne.s32.totalorder %s96, %s99
      %p108 = scmp.eq.s32.totalorder %s18, 1
      %p109 = por %p107, %p108
      %p110 = scmp.ne.s32.totalorder %s99, %s100
      %p111 = scmp.eq.s32.totalorder %s18, 0
      %p112 = por %p110, %p111
      %p113 = scmp.ne.s32.totalorder %s99, %s100
      %p114 = scmp.eq.s32.totalorder %s19, 1
      %p115 = por %p113, %p114
      %p117 = scmp.ne.s32.totalorder %s100, %s116
      %p118 = scmp.eq.s32.totalorder %s19, 0
      %p119 = por %p117, %p118
      %s120 = ssub.s32 %s20, %s39
      %s121 = ssub.s32 %s21, %s35
      %s122 = sor.u32 %s120, %s121
      %p123 = scmp.eq.s32.totalorder %s122, 0
      %s125 = sadd.s32 %s124, 1
      %s126 = scalar_select %p123, %s124, %s125
      %p129 = pneg %p123
      %p130 = scmp.eq.s32.totalorder %s13, 1
      %p131 = por %p129, %p130
      %p132 = scmp.ne.s32.totalorder %s124, %s127
      %p133 = scmp.eq.s32.totalorder %s13, 0
      %p134 = por %p132, %p133
      %p135 = scmp.ne.s32.totalorder %s124, %s127
      %p136 = scmp.eq.s32.totalorder %s18, 1
      %p137 = por %p135, %p136
      %p138 = scmp.ne.s32.totalorder %s127, %s128
      %p139 = scmp.eq.s32.totalorder %s18, 0
      %p140 = por %p138, %p139
      %p141 = scmp.ne.s32.totalorder %s127, %s128
      %p142 = scmp.eq.s32.totalorder %s19, 1
      %p143 = por %p141, %p142
      %p145 = scmp.ne.s32.totalorder %s128, %s144
      %p146 = scmp.eq.s32.totalorder %s19, 0
      %p147 = por %p145, %p146
      %p148 = scmp.le.s32.totalorder 1, %s13
      %p149 = scmp.lt.s32.totalorder %s13, 3
      %p150 = pnand %p148, %p149
      %p151 = pneg %p150
      // Predicated region
      $region9: #{tpu_custom_call.1} parent=5 // pred_check
        _
      $region10: #{tpu_custom_call.1} parent=5 // pred_check_branch
        %153 = sbr.rel (%p150) target = $region12
      $region11: #{tpu_custom_call.1} parent=5 // pred_region
        %s154 = ssub.s32 %s13, 1
        // Predicated region
        $region13: #{tpu_custom_call.1} parent=11 // pred_check
          %p155 = pneg %p86
        $region14: #{tpu_custom_call.1} parent=11 // pred_check_branch
          %157 = sbr.rel (%p155) target = $region16
        $region15: #{tpu_custom_call.1} parent=11 // pred_region
          %159 = vsyncadd [#allocation7], 0
          %s160 = smul.addr %s25, 4
          %s161 = scalar_lea.hbm %s1, %s160
          %s162 = sshll.u32 %s161, 4
          %s163 = int_to_ptr.hbm [resolvable:$true] %s162
          %s164 = sshll.u32 [#allocation6], 4
          %s165 = int_to_ptr.vmem [resolvable:$true] %s164
          %170 = dma.hbm_to_vmem [thread:$0]  %s163, 256, %s165, [#allocation7], 128, 64, 4
        $region16: #{tpu_custom_call.1} parent=11 // pred_fallthru
          _
        // Predicated region
        $region17: #{tpu_custom_call.1} parent=11 // pred_check
          %p171 = pneg %p112
        $region18: #{tpu_custom_call.1} parent=11 // pred_check_branch
          %173 = sbr.rel (%p171) target = $region20
        $region19: #{tpu_custom_call.1} parent=11 // pred_region
          %175 = vsyncadd [#allocation7], 0
          %s176 = scalar_lea.hbm %s2, %s25
          %s178 = sshll.u32 %s176, 4
          %s179 = int_to_ptr.hbm [resolvable:$true] %s178
          %s180 = sshll.u32 [#allocation8], 4
          %s181 = int_to_ptr.vmem [resolvable:$true] %s180
          %183 = dma.hbm_to_vmem [thread:$0]  %s179, 16, %s181, [#allocation7]
        $region20: #{tpu_custom_call.1} parent=11 // pred_fallthru
          _
      $region12: #{tpu_custom_call.1} parent=5 // pred_fallthru
        _
      %p184 = scmp.lt.s32.totalorder %s13, 2
      // Predicated region
      $region21: #{tpu_custom_call.1} parent=5 // pred_check
        %p185 = pneg %p184
      $region22: #{tpu_custom_call.1} parent=5 // pred_check_branch
        %187 = sbr.rel (%p185) target = $region24
      $region23: #{tpu_custom_call.1} parent=5 // pred_region
        // Predicated region
        $region25: #{tpu_custom_call.1} parent=23 // pred_check
          %p188 = pneg %p54
        $region26: #{tpu_custom_call.1} parent=23 // pred_check_branch
          %190 = sbr.rel (%p188) target = $region28
        $region27: #{tpu_custom_call.1} parent=23 // pred_region
          %s191 = sand.u32 %s44, 1
          %s192 = scalar_lea.sflag [#allocation5], %s191
          %s193 = sand.u32 %s44, 1
          %s194 = smul.addr %s193, 8
          %s195 = scalar_lea.vmem [#allocation4], %s194
          %197 = vsyncadd %s192, 0
          %s198 = sadd.s32 %s21, %s20
          %s199 = smul.addr %s198, 8
          %s200 = scalar_lea.hbm %s0, %s199
          %s202 = sshll.u32 %s200, 4
          %s203 = int_to_ptr.hbm [resolvable:$true] %s202
          %s204 = sshll.u32 %s195, 4
          %s205 = int_to_ptr.vmem [resolvable:$true] %s204
          %207 = dma.hbm_to_vmem [thread:$0]  %s203, 128, %s205, %s192
        $region28: #{tpu_custom_call.1} parent=23 // pred_fallthru
          _
      $region24: #{tpu_custom_call.1} parent=5 // pred_fallthru
        _
      %p208 = scmp.le.s32.totalorder 1, %s13
      %p209 = scmp.lt.s32.totalorder %s13, 3
      %p210 = pnand %p208, %p209
      %p211 = pneg %p210
      // Predicated region
      $region29: #{tpu_custom_call.1} parent=5 // pred_check
        _
      $region30: #{tpu_custom_call.1} parent=5 // pred_check_branch
        %213 = sbr.rel (%p210) target = $region32
      $region31: #{tpu_custom_call.1} parent=5 // pred_region
        %s214 = ssub.s32 %s13, 1
        %s215 = sand.u32 %s47, 1
        %s216 = scalar_lea.sflag [#allocation5], %s215
        %s217 = sand.u32 %s47, 1
        %s218 = smul.addr %s217, 8
        %s219 = scalar_lea.vmem [#allocation4], %s218
        // Predicated region
        $region33: #{tpu_custom_call.1} parent=31 // pred_check
          %p220 = pneg %p60
        $region34: #{tpu_custom_call.1} parent=31 // pred_check_branch
          %222 = sbr.rel (%p220) target = $region36
        $region35: #{tpu_custom_call.1} parent=31 // pred_region
          %224 = dma.done %s216, 128
        $region36: #{tpu_custom_call.1} parent=31 // pred_fallthru
          _
        // Predicated region
        $region37: #{tpu_custom_call.1} parent=31 // pred_check
          %p225 = pneg %p86
        $region38: #{tpu_custom_call.1} parent=31 // pred_check_branch
          %227 = sbr.rel (%p225) target = $region40
        $region39: #{tpu_custom_call.1} parent=31 // pred_region
          %229 = dma.done [#allocation7], 256
        $region40: #{tpu_custom_call.1} parent=31 // pred_fallthru
          _
        // Predicated region
        $region41: #{tpu_custom_call.1} parent=31 // pred_check
          %p230 = pneg %p112
        $region42: #{tpu_custom_call.1} parent=31 // pred_check_branch
          %232 = sbr.rel (%p230) target = $region44
        $region43: #{tpu_custom_call.1} parent=31 // pred_region
          %234 = dma.done [#allocation7], 16
        $region44: #{tpu_custom_call.1} parent=31 // pred_fallthru
          _
        %s235 = sand.u32 %s47, 1
        %s236 = scalar_lea.sflag [#allocation5], %s235
        %s237 = sand.u32 %s47, 1
        %s238 = smul.addr %s237, 8
        %s239 = scalar_lea.vmem [#allocation4], %s238
        %p240 = pneg %p60
        %p241 = pneg %p57
        %p242 = pneg %p86
        %p243 = pneg %p83
        %p244 = pneg %p112
        %p245 = pneg %p109
        %p246 = pneg %p140
        %p247 = pneg %p137
        %p248 = scmp.lt.s32.totalorder %s23, 1
        %s249 = scalar_select %p248, %s23, 1
        %p250 = scmp.lt.s32.totalorder %s24, 0
        %s251 = scalar_select %p250, %s24, 0
        %s252 = sadd.s32 %s251, %s249
        %s253 = smul.addr %s252, 8
        %s254 = scalar_lea.vmem %s3, %s253
        %p255 = scmp.lt.s32.totalorder %s23, 1
        %s256 = scalar_select %p255, %s23, 1
        %p257 = scmp.lt.s32.totalorder %s24, 0
        %s258 = scalar_select %p257, %s24, 0
        %s259 = sadd.s32 %s258, %s256
        %s260 = smul.addr %s259, 8
        %s261 = scalar_lea.vmem %s3, %s260
        %p263 = scmp.eq.s32.totalorder %s25, 0
        // Predicated region
        $region45: #{tpu_custom_call.1} parent=31 // pred_check
          %p264 = pneg %p263
        $region46: #{tpu_custom_call.1} parent=31 // pred_check_branch
          %266 = sbr.rel (%p264) target = $region48
        $region47: #{tpu_custom_call.1} parent=31 // pred_region
          %vm267 = vcmask 7168
          %268 = vst.msk [vmem:[#allocation2] sm:$0xff] %vm267, -1e+30
          %269 = vst.msk [vmem:[#allocation3] sm:$0xff] %vm267, 0.0
        $region48: #{tpu_custom_call.1} parent=31 // pred_fallthru
          _
        %v270 = vld [vmem:[%s219] sm:$0xff]
        %v271 = vpack.c.bf16 %v270, %v270
        %v272 = vld [vmem:[#allocation6] sm:$0xf]
        %v273 = vld [vmem:[#allocation6 + $0x4] sm:$0xf]
        %v274 = vld [vmem:[#allocation6 + $0x8] sm:$0xf]
        %v275 = vld [vmem:[#allocation6 + $0xc] sm:$0xf]
        %v276 = vld [vmem:[#allocation8] sm:$0x1]
        %v278 = vperm.slane %v276, 0
        %v284 = vunpack.c.l.b16 %v272
        %v285 = vunpack.c.l.b16 %v273
        %v286 = vunpack.c.l.b16 %v274
        %v287 = vunpack.c.l.b16 %v275
        %v288 = vpack.c.b16 %v285, %v284
        %v289 = vpack.c.b16 %v287, %v286
        %vm292 = vcmask 261120
        %v294 = vsel %vm292, %v271, 0
        %296 = vmatpush.bf16.msra.mxu0 0
        %297 = vmatpush.bf16.msra.mxu0 0
        %298 = vmatpush.bf16.msra.mxu0 0
        %299 = vmatpush.bf16.msra.mxu0 0
        %300 = vmatpush.bf16.msra.mxu0 0
        %301 = vmatpush.bf16.msra.mxu0 0
        %302 = vmatpush.bf16.msra.mxu0 %v289
        %303 = vmatpush.bf16.msra.mxu0 %v288
        %304 = vmatmul.bf16.gmra.mxu0 %v294
        %v305 = vpop.f32.mrf.mxu0
        %v306 = vadd.f32 %v278, %v305
        %v307 = vpop.f32.mrf.mxu0
        %308 = vdwg.mxu0
        %s309 = smul.u32 %s25, 128
        %v310 = vlaneseq
        %v311 = vand.u32 %v310, 127
        %v312 = vstv %s309
        %v313 = vadd.s32 %v312, %v311
        %vm314 = vcmp.lt.s32.totalorder %v313, 128
        %v315 = vsel %vm314, %v306, -1e+30
        %v316 = vld [vmem:[#allocation2] sm:$0xff]
        %317 = vmax.xlane.f32.xlu0 %v315
        %v318 = vpop.xlane.xlu0 %317
        %v319 = vmax.f32 %v316, %v318
        %v320 = vld [vmem:[#allocation3] sm:$0xff]
        %v321 = vsub.f32 %v316, %v319
        %v322 = vmul.f32 %v321, 1.442695
        %v323 = vpow.pop %v322
        %v324 = vmul.f32 %v320, %v323
        %326 = vset.pattern.permute.xlu0 0
        %327 = vperm.xlu0 %326, %v319
        %v328 = vpop.permute.xlu0 %327
        %v330 = vsub.f32 %v315, %v328
        %v331 = vmul.f32 %v330, 1.442695
        %v332 = vpow.pop %v331
        %333 = vadd.xlane.f32.xlu0 %v332
        %v334 = vpop.xlane.xlu0 %333
        %v335 = vadd.f32 %v324, %v334
        %vm336 = vcmask 7168
        %337 = vst.msk [vmem:[#allocation3] sm:$0xff] %vm336, %v335
        %338 = vst.msk [vmem:[#allocation2] sm:$0xff] %vm336, %v319
        // Predicated region
        $region49: #{tpu_custom_call.1} parent=31 // pred_check
          %p339 = pneg %p263
        $region50: #{tpu_custom_call.1} parent=31 // pred_check_branch
          %341 = sbr.rel (%p339) target = $region52
        $region51: #{tpu_custom_call.1} parent=31 // pred_region
          %v342 = vld [vmem:[#allocation2] sm:$0xff]
          %v343 = vld [vmem:[#allocation3] sm:$0xff]
          %v344 = vlog2.pop %v343
          %v345 = vmul.f32 %v344, 0.6931472
          %v346 = vadd.f32 %v342, %v345
          %347 = vst.msk [vmem:[%s261] sm:$0xff] %vm336, %v346
        $region52: #{tpu_custom_call.1} parent=31 // pred_fallthru
          _
        %p348 = scmp.lt.s32.totalorder %s23, 1
        %s349 = scalar_select %p348, %s23, 1
        %p350 = scmp.lt.s32.totalorder %s24, 0
        %s351 = scalar_select %p350, %s24, 0
        %s352 = sadd.s32 %s351, %s349
        %s353 = smul.addr %s352, 8
        %s354 = scalar_lea.vmem %s3, %s353
        // Predicated region
        $region53: #{tpu_custom_call.1} parent=31 // pred_check
          %p355 = pneg %p137
        $region54: #{tpu_custom_call.1} parent=31 // pred_check_branch
          %357 = sbr.rel (%p355) target = $region56
        $region55: #{tpu_custom_call.1} parent=31 // pred_region
          _
        $region56: #{tpu_custom_call.1} parent=31 // pred_fallthru
          _
      $region32: #{tpu_custom_call.1} parent=5 // pred_fallthru
        _
      %p358 = scmp.le.s32.totalorder 2, %s13
      // Predicated region
      $region57: #{tpu_custom_call.1} parent=5 // pred_check
        %p359 = pneg %p358
      $region58: #{tpu_custom_call.1} parent=5 // pred_check_branch
        %361 = sbr.rel (%p359) target = $region60
      $region59: #{tpu_custom_call.1} parent=5 // pred_region
        %s362 = ssub.s32 %s13, 2
        // Predicated region
        $region61: #{tpu_custom_call.1} parent=59 // pred_check
          %p363 = pneg %p143
        $region62: #{tpu_custom_call.1} parent=59 // pred_check_branch
          %365 = sbr.rel (%p363) target = $region64
        $region63: #{tpu_custom_call.1} parent=59 // pred_region
          %p366 = scmp.lt.s32.totalorder %s26, 1
          %s367 = scalar_select %p366, %s26, 1
          %p368 = scmp.lt.s32.totalorder %s27, 0
          %s369 = scalar_select %p368, %s27, 0
          %s370 = sadd.s32 %s369, %s367
          %s371 = smul.addr %s370, 8
          %s372 = scalar_lea.vmem %s3, %s371
        $region64: #{tpu_custom_call.1} parent=59 // pred_fallthru
          _
      $region60: #{tpu_custom_call.1} parent=5 // pred_fallthru
        _
    $region6: #{tpu_custom_call.1} parent=1 // loop_footer
      %s17 = sadd.s32 1, %s13
    $region7: #{tpu_custom_call.1} parent=1 // loop_footer_branch
      %12 = sbr.rel target = $region3
    $region8: #{tpu_custom_call.1} parent=1 // loop_exit
      _
    %373 = vsyncpa [#allocation5], 1
    %s374 = scalar_lea.sflag [#allocation5], 1
    %375 = vsyncpa %s374, 1
    %376 = vsyncpa [#allocation7], 1

</llo_original>
